<compile_context>
chip_gen: v7x
topology: tpu7x:2x2x1
jax: 0.10.0
libtpu: 0.0.40
codegen_flags: <defaults>
</compile_context>

<pallas_src>
import math
import functools

import jax
import jax.numpy as jnp
from jax.experimental import pallas as pl
from jax.experimental.pallas import tpu as pltpu


def _patch_merge_kernel(x_ref, w_ref, b_ref, o_ref):
    # x_ref: (TM, K) rows; w_ref: (K, D) affine-folded weight; b_ref: (1, D) f32.
    x = x_ref[...].astype(jnp.float32)
    mean = jnp.mean(x, axis=-1, keepdims=True)
    xc = x - mean
    var = jnp.mean(xc * xc, axis=-1, keepdims=True)        # biased, like torch LN
    xn = xc * jax.lax.rsqrt(var + 1e-5)                    # f32 statistics
    # MXU runs in the weight's native dtype (bf16 weights -> full-rate bf16 MXU;
    # f32 weights -> exact f32 path).  No per-iteration recast of the weight.
    y = jnp.dot(xn.astype(w_ref.dtype), w_ref[...],
                preferred_element_type=jnp.float32)
    o_ref[...] = (y + b_ref[...]).astype(o_ref.dtype)


def _round_up(x, m):
    return ((x + m - 1) // m) * m


def _choose_tile_m(M, K, D, itemsize):
    """Largest row tile (multiple of 8) that fits a conservative VMEM budget."""
    # Budget for the double-buffered streaming tiles (input + output).  Kept
    # well under the smallest scoped-VMEM default we target (32 MiB on v7x),
    # leaving room for the (double-buffered) weight and compiler scratch.
    budget = 12 * 1024 * 1024
    row_bytes = 2 * (K + D) * itemsize          # in + out tiles, double-buffered
    tm = 1024
    while tm > 8 and tm * row_bytes > budget:
        tm //= 2
    m8 = _round_up(M, 8)
    if m8 <= tm:
        return m8                               # whole problem fits in one tile
    # Keep a handful of grid steps so the parallel axis can be sharded across
    # the two TensorCores on v7x without shrinking tiles below a useful size.
    while tm > 128 and pl.cdiv(m8, tm) < 4:
        tm //= 2
    return tm


@functools.partial(jax.jit, static_argnames=("n_agg",))
def patch_merge(x, gamma, beta, w, b, *, n_agg=4):
    """Equivalent of PatchMerge.forward.

    x:     (B, E, N, D) float
    gamma: (n_agg*D,)   LayerNorm weight
    beta:  (n_agg*D,)   LayerNorm bias
    w:     (D, n_agg*D) Linear weight (torch layout)
    b:     (D,)         Linear bias
    returns (B, E, max(1, ceil(N/n_agg)), D)
    """
    B, E, N, D = x.shape
    K = n_agg * D

    # --- patch padding / repetition (index plumbing, plain JAX) ---
    if N < n_agg:
        reps = math.ceil(n_agg / N)
        x = jnp.tile(x, (1, 1, reps, 1))[:, :, :n_agg, :]
    else:
        pad_num = N % n_agg
        if pad_num != 0:
            pad_num = n_agg - pad_num
            x = jnp.concatenate([x, x[:, :, -pad_num:, :]], axis=-2)
    n_new = x.shape[2] // n_agg

    # torch's interleaved gather (x[:,:,i::n_agg,:] concat on features) equals a
    # plain reshape, because the n_agg source patches of each merged row are
    # consecutive along the patch axis.
    rows = x.reshape(B * E * n_new, K)
    M = rows.shape[0]

    itemsize = jnp.dtype(x.dtype).itemsize
    TM = _choose_tile_m(M, K, D, itemsize)
    M_pad = _round_up(M, TM)
    if M_pad != M:
        # Padded zero rows go through LN (var=0 -> xn=0) and emit b'; they are
        # sliced off below.  jnp.pad instead of concatenate to avoid an extra
        # full-array copy pattern.
        rows = jnp.pad(rows, ((0, M_pad - M), (0, 0)))

    # --- fold the LayerNorm affine into the projection (exact, done in f32) ---
    #   (xn*gamma + beta) @ W.T + b == xn @ (gamma[:,None]*W.T) + (beta@W.T + b)
    w32 = w.astype(jnp.float32)
    gamma32 = gamma.astype(jnp.float32)
    beta32 = beta.astype(jnp.float32)
    w_fold = (w32 * gamma32[None, :]).T.astype(x.dtype)               # (K, D)
    b_fold = (beta32 @ w32.T + b.astype(jnp.float32)).reshape(1, D)   # f32

    grid = (M_pad // TM,)

    # Explicit scoped-VMEM limit: raises v5e's 16 MiB default, stays well under
    # v7x's 64 MiB physical VMEM (our footprint is sized to <~14 MiB anyway).
    vmem_need = 2 * TM * (K + D) * itemsize + 2 * K * D * itemsize + 2 * D * 4
    vmem_limit = int(min(64 * 1024 * 1024,
                         max(32 * 1024 * 1024, 2 * vmem_need)))

    out = pl.pallas_call(
        _patch_merge_kernel,
        out_shape=jax.ShapeDtypeStruct((M_pad, D), x.dtype),
        grid_spec=pltpu.PrefetchScalarGridSpec(
            num_scalar_prefetch=0,
            grid=grid,
            in_specs=[
                pl.BlockSpec((TM, K), lambda i: (i, 0)),
                # Grid-invariant operands: constant index_map, so Pallas skips
                # re-DMA across grid steps (still double-buffered in VMEM;
                # negligible at these weight sizes).
                pl.BlockSpec((K, D), lambda i: (0, 0)),
                pl.BlockSpec((1, D), lambda i: (0, 0)),
            ],
            out_specs=pl.BlockSpec((TM, D), lambda i: (i, 0)),
        ),
        compiler_params=pltpu.CompilerParams(
            dimension_semantics=("parallel",),
            vmem_limit_bytes=vmem_limit),
    )(rows, w_fold, b_fold)
    # TODO(synk): if D < 128 ever binds on the store path, regroup the output
    # to a lane-dense (M_pad // (128//D), 128) layout; skipped here since the
    # kernel is input-bandwidth bound (K = 4*D of input per D of output).

    return out[:M].reshape(B, E, n_new, D)


def _reference(x, gamma, beta, w, b, n_agg=4):
    """Pure-JAX reference mirroring the torch forward (explicit interleaved gather)."""
    B, E, N, D = x.shape
    if N < n_agg:
        reps = math.ceil(n_agg / N)
        x = jnp.tile(x, (1, 1, reps, 1))[:, :, :n_agg, :]
    else:
        pad_num = N % n_agg
        if pad_num != 0:
            pad_num = n_agg - pad_num
            x = jnp.concatenate([x, x[:, :, -pad_num:, :]], axis=-2)
    parts = [x[:, :, i::n_agg, :] for i in range(n_agg)]   # torch's gather
    merged = jnp.concatenate(parts, axis=-1)
    mean = jnp.mean(merged, axis=-1, keepdims=True)
    var = jnp.mean((merged - mean) ** 2, axis=-1, keepdims=True)
    xn = (merged - mean) / jnp.sqrt(var + 1e-5) * gamma + beta
    return xn @ w.T + b


if __name__ == "__main__":
    key = jax.random.PRNGKey(0)
    d_model = 32
    n_agg = 4
    B, E, N = 2, 4, 10          # N % n_agg != 0 -> exercises the pad path

    k_x, k_w, k_b, k_g, k_bt, k_x2 = jax.random.split(key, 6)
    K = n_agg * d_model
    x = jax.random.normal(k_x, (B, E, N, d_model), dtype=jnp.float32)

    bound = 1.0 / math.sqrt(K)
    w = jax.random.uniform(k_w, (d_model, K), minval=-bound, maxval=bound,
                           dtype=jnp.float32)
    b = jax.random.uniform(k_b, (d_model,), minval=-bound, maxval=bound,
                           dtype=jnp.float32)
    # Non-trivial LN affine so the weight-fold path is actually exercised.
    gamma = 1.0 + 0.1 * jax.random.normal(k_g, (K,), dtype=jnp.float32)
    beta = 0.1 * jax.random.normal(k_bt, (K,), dtype=jnp.float32)

    out = jax.block_until_ready(patch_merge(x, gamma, beta, w, b, n_agg=n_agg))
    ref = _reference(x, gamma, beta, w, b, n_agg=n_agg)
    assert out.shape == ref.shape, (out.shape, ref.shape)
    assert jnp.allclose(out, ref, atol=1e-4, rtol=1e-4), "mismatch (pad path)"

    # n_patch < n_agg -> exercises the repeat/tile path.
    x2 = jax.random.normal(k_x2, (B, E, 3, d_model), dtype=jnp.float32)
    out2 = jax.block_until_ready(patch_merge(x2, gamma, beta, w, b, n_agg=n_agg))
    ref2 = _reference(x2, gamma, beta, w, b, n_agg=n_agg)
    assert out2.shape == ref2.shape, (out2.shape, ref2.shape)
    assert jnp.allclose(out2, ref2, atol=1e-4, rtol=1e-4), "mismatch (tile path)"

    print("KERNEL_OK")
</pallas_src>

<mosaic_0001>
module attributes {stable_mosaic.version = 11 : i64} {
  func.func @_patch_merge_kernel(%arg0: i32, %arg1: memref<24x128xf32, #tpu.memory_space<vmem>>, %arg2: memref<128x32xf32, #tpu.memory_space<vmem>>, %arg3: memref<1x32xf32, #tpu.memory_space<vmem>>, %arg4: memref<24x32xf32, #tpu.memory_space<vmem>>) attributes {dimension_semantics = [#tpu.dimension_semantics<parallel>], iteration_bounds = array<i64: 1>, scalar_prefetch = 0 : i64, scratch_operands = 0 : i64, tpu.core_type = #tpu.core_type<tc>, window_params = [{transform_indices = @transform_0, window_bounds = array<i64: 24, 128>}, {pipeline_mode = #tpu.pipeline_mode<synchronous>, transform_indices = @transform_1, window_bounds = array<i64: 128, 32>}, {pipeline_mode = #tpu.pipeline_mode<synchronous>, transform_indices = @transform_2, window_bounds = array<i64: 1, 32>}, {transform_indices = @transform_3, window_bounds = array<i64: 24, 32>}]} {
    %c0 = arith.constant 0 : index
    %c0_0 = arith.constant 0 : index
    %0 = vector.load %arg1[%c0, %c0_0] : memref<24x128xf32, #tpu.memory_space<vmem>>, vector<24x128xf32>
    %cst = arith.constant dense<0.000000e+00> : vector<24xf32>
    %1 = vector.multi_reduction <add>, %0, %cst [1] : vector<24x128xf32> to vector<24xf32>
    %2 = vector.shape_cast %1 : vector<24xf32> to vector<24x1xf32>
    %cst_1 = arith.constant 1.280000e+02 : f32
    %3 = vector.broadcast %cst_1 : f32 to vector<24x1xf32>
    %4 = arith.divf %2, %3 : vector<24x1xf32>
    %5 = vector.broadcast %4 : vector<24x1xf32> to vector<24x128xf32>
    %6 = arith.subf %0, %5 : vector<24x128xf32>
    %7 = arith.mulf %6, %6 : vector<24x128xf32>
    %cst_2 = arith.constant dense<0.000000e+00> : vector<24xf32>
    %8 = vector.multi_reduction <add>, %7, %cst_2 [1] : vector<24x128xf32> to vector<24xf32>
    %9 = vector.shape_cast %8 : vector<24xf32> to vector<24x1xf32>
    %cst_3 = arith.constant 1.280000e+02 : f32
    %10 = vector.broadcast %cst_3 : f32 to vector<24x1xf32>
    %11 = arith.divf %9, %10 : vector<24x1xf32>
    %cst_4 = arith.constant 9.99999974E-6 : f32
    %12 = vector.broadcast %cst_4 : f32 to vector<24x1xf32>
    %13 = arith.addf %11, %12 : vector<24x1xf32>
    %14 = math.rsqrt %13 : vector<24x1xf32>
    %15 = vector.broadcast %14 : vector<24x1xf32> to vector<24x128xf32>
    %16 = arith.mulf %6, %15 : vector<24x128xf32>
    %c0_5 = arith.constant 0 : index
    %c0_6 = arith.constant 0 : index
    %17 = vector.load %arg2[%c0_5, %c0_6] : memref<128x32xf32, #tpu.memory_space<vmem>>, vector<128x32xf32>
    %cst_7 = arith.constant dense<0.000000e+00> : vector<24x32xf32>
    %18 = tpu.matmul %16, %17, %cst_7 {dimension_numbers = #tpu.dot_dimension_numbers<[1], [0], [0], [1], [0, 0, 1, 1], [], []>} : vector<24x128xf32>, vector<128x32xf32>, vector<24x32xf32> -> vector<24x32xf32>
    %c0_8 = arith.constant 0 : index
    %c0_9 = arith.constant 0 : index
    %19 = vector.load %arg3[%c0_8, %c0_9] : memref<1x32xf32, #tpu.memory_space<vmem>>, vector<1x32xf32>
    %20 = vector.broadcast %19 : vector<1x32xf32> to vector<24x32xf32>
    %21 = arith.addf %18, %20 : vector<24x32xf32>
    %c0_10 = arith.constant 0 : index
    %c0_11 = arith.constant 0 : index
    %22 = vector.load %arg4[%c0_10, %c0_11] : memref<24x32xf32, #tpu.memory_space<vmem>>, vector<24x32xf32>
    tpu.vector_store %arg4[%c0_10, %c0_11], %21 {strides = array<i32>} : memref<24x32xf32, #tpu.memory_space<vmem>>, vector<24x32xf32>,
    return
  }
  func.func @transform_0(%arg0: i32) -> (i32, i32) {
    %c0_i32 = arith.constant 0 : i32
    %c0_i32_0 = arith.constant 0 : i32
    return %arg0, %c0_i32 : i32, i32
  }
  func.func @transform_1(%arg0: i32) -> (i32, i32) {
    %c0_i32 = arith.constant 0 : i32
    %c0_i32_0 = arith.constant 0 : i32
    %c0_i32_1 = arith.constant 0 : i32
    return %c0_i32, %c0_i32_0 : i32, i32
  }
  func.func @transform_2(%arg0: i32) -> (i32, i32) {
    %c0_i32 = arith.constant 0 : i32
    %c0_i32_0 = arith.constant 0 : i32
    %c0_i32_1 = arith.constant 0 : i32
    return %c0_i32, %c0_i32_0 : i32, i32
  }
  func.func @transform_3(%arg0: i32) -> (i32, i32) {
    %c0_i32 = arith.constant 0 : i32
    %c0_i32_0 = arith.constant 0 : i32
    return %arg0, %c0_i32 : i32, i32
  }
}

</mosaic_0001>

<llo_original>
// kernel: patch_merge.1
$region0: #{patch_merge.1}
  #allocation0 [shape = 'u32[]', space=smem, size = 0x4, offset = 0x4, fixed_abs, tag = 'smem constant byte address 0x4 - core index']
  #allocation1 [shape = 'u32[144,128]{1,0:T(1,128)}', space=vmem, size = 0x12000, scoped, tag = 'internal scratch']
  %s0 = inlined_call_operand.vmem [shape: f32[24,128], index: 0, kind: input, shape index: {}]
  %s1 = inlined_call_operand.vmem [shape: f32[128,32], index: 1, kind: input, shape index: {}]
  %s2 = inlined_call_operand.vmem [shape: f32[1,32], index: 2, kind: input, shape index: {}]
  %s3 = inlined_call_operand.vmem [shape: f32[24,32], index: 3, kind: output, shape index: {}]
  %s4 = sld [smem:[#allocation0]]
  $region22: #{patch_merge.1} parent=0
    _
  %s6 = ssub.s32 1, %s4
  %s7 = scalar_select 0, %s6, %s4
  // Predicated region
  $region2: #{patch_merge.1} parent=0 // pred_check
    _
  $region3: #{patch_merge.1} parent=0 // pred_check_branch
    %9 = sbr.rel (0) target = $region5
  $region4: #{patch_merge.1} parent=0 // pred_region
    _
  $region5: #{patch_merge.1} parent=0 // pred_fallthru
    _
  // Predicated region
  $region6: #{patch_merge.1} parent=0 // pred_check
    _
  $region7: #{patch_merge.1} parent=0 // pred_check_branch
    %11 = sbr.rel (0) target = $region9
  $region8: #{patch_merge.1} parent=0 // pred_region
    _
  $region9: #{patch_merge.1} parent=0 // pred_fallthru
    _
  // Predicated region
  $region10: #{patch_merge.1} parent=0 // pred_check
    _
  $region11: #{patch_merge.1} parent=0 // pred_check_branch
    %13 = sbr.rel (0) target = $region13
  $region12: #{patch_merge.1} parent=0 // pred_region
    _
  $region13: #{patch_merge.1} parent=0 // pred_fallthru
    _
  %v14 = vld [vmem:[%s0] sm:$0xff]
  %v15 = vld [vmem:[%s0 + $0x8] sm:$0xff]
  %v16 = vld [vmem:[%s0 + $0x10] sm:$0xff]
  %17 = vadd.xlane.f32.xlu0 %v14
  %v18 = vpop.xlane.xlu0 %17
  %19 = vadd.xlane.f32.xlu0 %v15
  %v20 = vpop.xlane.xlu0 %19
  %21 = vadd.xlane.f32.xlu0 %v16
  %v22 = vpop.xlane.xlu0 %21
  %v23 = vrcp.pop 128.0
  %v24 = vmul.f32 %v18, %v23
  %v25 = vmul.f32 %v20, %v23
  %v26 = vmul.f32 %v22, %v23
  %v27 = vsub.f32 %v14, %v24
  %v28 = vsub.f32 %v15, %v25
  %v29 = vsub.f32 %v16, %v26
  %v30 = vmul.f32 %v27, %v27
  %v31 = vmul.f32 %v28, %v28
  %v32 = vmul.f32 %v29, %v29
  %33 = vadd.xlane.f32.xlu0 %v30
  %v34 = vpop.xlane.xlu0 %33
  %35 = vadd.xlane.f32.xlu0 %v31
  %v36 = vpop.xlane.xlu0 %35
  %37 = vadd.xlane.f32.xlu0 %v32
  %v38 = vpop.xlane.xlu0 %37
  %v39 = vmul.f32 %v34, %v23
  %v40 = vmul.f32 %v36, %v23
  %v41 = vmul.f32 %v38, %v23
  %v42 = vadd.f32 %v39, 1e-05
  %v43 = vadd.f32 %v40, 1e-05
  %v44 = vadd.f32 %v41, 1e-05
  %v45 = vrsqrt.pop %v42
  %v46 = vrsqrt.pop %v43
  %v47 = vrsqrt.pop %v44
  %v48 = vmul.f32 %v27, %v45
  %v49 = vmul.f32 %v28, %v46
  %v50 = vmul.f32 %v29, %v47
  %v51 = vld [vmem:[%s1] sm:$0xff]
  %v52 = vld [vmem:[%s1 + $0x8] sm:$0xff]
  %v53 = vld [vmem:[%s1 + $0x10] sm:$0xff]
  %v54 = vld [vmem:[%s1 + $0x18] sm:$0xff]
  %v55 = vld [vmem:[%s1 + $0x20] sm:$0xff]
  %v56 = vld [vmem:[%s1 + $0x28] sm:$0xff]
  %v57 = vld [vmem:[%s1 + $0x30] sm:$0xff]
  %v58 = vld [vmem:[%s1 + $0x38] sm:$0xff]
  %v59 = vld [vmem:[%s1 + $0x40] sm:$0xff]
  %v60 = vld [vmem:[%s1 + $0x48] sm:$0xff]
  %v61 = vld [vmem:[%s1 + $0x50] sm:$0xff]
  %v62 = vld [vmem:[%s1 + $0x58] sm:$0xff]
  %v63 = vld [vmem:[%s1 + $0x60] sm:$0xff]
  %v64 = vld [vmem:[%s1 + $0x68] sm:$0xff]
  %v65 = vld [vmem:[%s1 + $0x70] sm:$0xff]
  %v66 = vld [vmem:[%s1 + $0x78] sm:$0xff]
  %v67 = vld [vmem:[%s2] sm:$0x1]
  %v69 = vlaneseq
  %v70 = vshrl.u32 %v69, 7
  %v71 = vsub.s32 0, %v70
  %v72 = vrot.slane %v67, %v71
  %74 = vmatprep.subr.mxu0 0.0
  %75 = vmatpush1.msra.mxu0 %v51
  %76 = vmatprep.subr.mxu0 0.0
  %77 = vmatpush1.msra.mxu0 %v52
  %78 = vmatprep.subr.mxu0 0.0
  %79 = vmatpush1.msra.mxu0 %v53
  %80 = vmatprep.subr.mxu0 0.0
  %81 = vmatpush1.msra.mxu0 %v54
  %82 = vmatprep.subr.mxu0 0.0
  %83 = vmatpush1.msra.mxu0 %v55
  %84 = vmatprep.subr.mxu0 0.0
  %85 = vmatpush1.msra.mxu0 %v56
  %86 = vmatprep.subr.mxu0 0.0
  %87 = vmatpush1.msra.mxu0 %v57
  %88 = vmatprep.subr.mxu0 0.0
  %89 = vmatpush1.msra.mxu0 %v58
  %90 = vmatprep.subr.mxu0 0.0
  %91 = vmatpush1.msra.mxu0 %v59
  %92 = vmatprep.subr.mxu0 0.0
  %93 = vmatpush1.msra.mxu0 %v60
  %94 = vmatprep.subr.mxu0 0.0
  %95 = vmatpush1.msra.mxu0 %v61
  %96 = vmatprep.subr.mxu0 0.0
  %97 = vmatpush1.msra.mxu0 %v62
  %98 = vmatprep.subr.mxu0 0.0
  %99 = vmatpush1.msra.mxu0 %v63
  %100 = vmatprep.subr.mxu0 0.0
  %101 = vmatpush1.msra.mxu0 %v64
  %102 = vmatprep.subr.mxu0 0.0
  %103 = vmatpush1.msra.mxu0 %v65
  %104 = vmatprep.subr.mxu0 0.0
  %105 = vmatpush1.msra.mxu0 %v66
  %106 = vmatprep.subr.mxu0 0.0
  %107 = vmatpush1.msra.mxu0 0.0
  %108 = vmatprep.subr.mxu0 0.0
  %109 = vmatpush1.msra.mxu0 0.0
  %110 = vmatprep.subr.mxu0 0.0
  %111 = vmatpush1.msra.mxu0 0.0
  %112 = vmatprep.subr.mxu0 0.0
  %113 = vmatpush1.msra.mxu0 0.0
  %114 = vmatprep.subr.mxu0 0.0
  %115 = vmatpush1.msra.mxu0 0.0
  %116 = vmatprep.subr.mxu0 0.0
  %117 = vmatpush1.msra.mxu0 0.0
  %118 = vmatprep.subr.mxu0 0.0
  %119 = vmatpush1.msra.mxu0 0.0
  %120 = vmatprep.subr.mxu0 0.0
  %121 = vmatpush1.msra.mxu0 0.0
  %122 = vmatprep.subr.mxu0 0.0
  %123 = vmatpush1.msra.mxu0 0.0
  %124 = vmatprep.subr.mxu0 0.0
  %125 = vmatpush1.msra.mxu0 0.0
  %126 = vmatprep.subr.mxu0 0.0
  %127 = vmatpush1.msra.mxu0 0.0
  %128 = vmatprep.subr.mxu0 0.0
  %129 = vmatpush1.msra.mxu0 0.0
  %130 = vmatprep.subr.mxu0 0.0
  %131 = vmatpush1.msra.mxu0 0.0
  %132 = vmatprep.subr.mxu0 0.0
  %133 = vmatpush1.msra.mxu0 0.0
  %134 = vmatprep.subr.mxu0 0.0
  %135 = vmatpush1.msra.mxu0 0.0
  %136 = vmatprep.subr.mxu0 0.0
  %137 = vmatpush1.msra.mxu0 0.0
  %138 = vmatprep.mubr.f32.mxu0 0.0
  %139 = vmatmul.mubr.f32.gmra.mrb[0].mxu0 %v48
  %v140 = vpop.f32.mrb[0].mxu0
  %v141 = vadd.f32 %v72, %v140
  %v142 = vpop.f32.mrb[0].mxu0
  %143 = vmatprep.mubr.f32.mxu0 0.0
  %144 = vmatmul.mubr.f32.gmra.mrb[0].mxu0 %v49
  %v145 = vpop.f32.mrb[0].mxu0
  %v146 = vadd.f32 %v72, %v145
  %v147 = vpop.f32.mrb[0].mxu0
  %148 = vmatprep.mubr.f32.mxu0 0.0
  %149 = vmatmul.mubr.f32.gmra.mrb[0].mxu0 %v50
  %v150 = vpop.f32.mrb[0].mxu0
  %v151 = vadd.f32 %v72, %v150
  %v152 = vpop.f32.mrb[0].mxu0
  %153 = vdwg.mxu0
  %vm154 = vcmask 261120
  %155 = vst.msk [vmem:[%s3] sm:$0xff] %vm154, %v141
  %156 = vst.msk [vmem:[%s3 + $0x8] sm:$0xff] %vm154, %v146
  %157 = vst.msk [vmem:[%s3 + $0x10] sm:$0xff] %vm154, %v151
  // Predicated region
  $region14: #{patch_merge.1} parent=0 // pred_check
    _
  $region15: #{patch_merge.1} parent=0 // pred_check_branch
    %159 = sbr.rel (0) target = $region17
  $region16: #{patch_merge.1} parent=0 // pred_region
    _
  $region17: #{patch_merge.1} parent=0 // pred_fallthru
    _
  // Predicated region
  $region18: #{patch_merge.1} parent=0 // pred_check
    _
  $region19: #{patch_merge.1} parent=0 // pred_check_branch
    %161 = sbr.rel (0) target = $region21
  $region20: #{patch_merge.1} parent=0 // pred_region
    _
  $region21: #{patch_merge.1} parent=0 // pred_fallthru
    _

</llo_original>
